<compile_context>
chip_gen: v7x
topology: tpu7x:2x2x1
jax: 0.10.0
libtpu: 0.0.40
codegen_flags: <defaults>
</compile_context>

<pallas_src>
import functools

import jax
import jax.numpy as jnp
from jax.experimental import pallas as pl
from jax.experimental.pallas import tpu as pltpu

_SMOOTH = 1.0
_VALUE_MASK_EXCLUDE = -1.0   # only used when is_mask_exclude=True

_LANE = 128
_SUBLANE = 8
_TARGET_BLOCK_BYTES = 4 << 20     # per-input, per-block VMEM footprint target (f32 -> 8192 rows)
_VMEM_LIMIT_BYTES = 40 << 20      # 2 inputs x 2 buffers x 4 MiB = 16 MiB used; safe on v5e/v6e/v7x
_MIN_PALLAS_ELEMENTS = 256 * 1024  # below this, the fused XLA path wins (launch latency dominates)


def _round_up(a, b):
    return (a + b - 1) // b * b


def _jnp_dice_loss(target, inputx, is_mask_exclude: bool):
    """Fused pure-jnp fallback path (also serves as the numerical reference)."""
    t = jnp.ravel(target).astype(jnp.float32)
    x = jnp.ravel(inputx).astype(jnp.float32)
    if is_mask_exclude:
        excl = t == _VALUE_MASK_EXCLUDE
        zero = jnp.zeros_like(t)
        t = jnp.where(excl, zero, t)
        x = jnp.where(excl, zero, x)
    return 1.0 - 2.0 * jnp.sum(t * x) / (jnp.sum(t) + jnp.sum(x) + _SMOOTH)


def _dice_kernel(t_ref, x_ref, acc_ref, *, block_rows, n_valid_rows,
                 needs_mask, is_mask_exclude):
    k = pl.program_id(0)

    @pl.when(k == 0)
    def _init():
        acc_ref[...] = jnp.zeros_like(acc_ref)

    # Upcast in-kernel: HBM traffic stays at the source dtype; arithmetic is f32
    # everywhere (v5e has no bf16 VPU).
    t = t_ref[...].astype(jnp.float32)
    x = x_ref[...].astype(jnp.float32)

    def accumulate(tv, xv):
        if is_mask_exclude:
            excl = tv == _VALUE_MASK_EXCLUDE
            zero = jnp.zeros_like(tv)
            tv = jnp.where(excl, zero, tv)
            xv = jnp.where(excl, zero, xv)
        # Reduce across vregs only (pure VPU adds, no per-step cross-lane XLU work):
        # (block_rows,128) -> (block_rows//8, 8, 128) -> sum(axis=0).
        shp = (block_rows // _SUBLANE, _SUBLANE, _LANE)
        acc_ref[0] += (tv * xv).reshape(shp).sum(axis=0)   # sum(t * x)
        acc_ref[1] += tv.reshape(shp).sum(axis=0)          # sum(t)
        acc_ref[2] += xv.reshape(shp).sum(axis=0)          # sum(x)

    if not needs_mask:
        accumulate(t, x)
    else:
        # Only the LAST block can be partial (its window extends past the real rows and
        # Pallas pads it with unspecified data).  Gate the iota+where masking with
        # pl.when so full interior blocks take the cheap path.
        is_partial = k == pl.num_programs(0) - 1

        @pl.when(jnp.logical_not(is_partial))
        def _full():
            accumulate(t, x)

        @pl.when(is_partial)
        def _masked():
            row0 = k * block_rows
            row_idx = row0 + jax.lax.broadcasted_iota(jnp.int32, (block_rows, _LANE), 0)
            valid = row_idx < n_valid_rows
            zero = jnp.zeros_like(t)
            # jnp.where (not *) so stale VMEM garbage (possibly NaN) cannot leak in.
            accumulate(jnp.where(valid, t, zero), jnp.where(valid, x, zero))


def dice_coefficient_loss(target, inputx, is_mask_exclude: bool = False, *,
                          min_pallas_elements: int = _MIN_PALLAS_ELEMENTS,
                          max_block_rows=None):
    """Equivalent of DiceCoefficient.forward(target, input) -> scalar loss."""
    t = jnp.ravel(target)
    x = jnp.ravel(inputx)
    n = t.shape[0]

    # Fast paths: (a) tiny inputs, where pallas_call launch / DMA-priming latency
    # dominates; (b) n not a multiple of 128, where building a lane-dense view would
    # require an HBM pad/slice copy (~3x the traffic of this mem-bound reduction).
    if n == 0 or n % _LANE != 0 or n < min_pallas_elements:
        return _jnp_dice_loss(t, x, is_mask_exclude)

    rows = n // _LANE
    t2 = t.reshape(rows, _LANE)   # free reshape: n % 128 == 0
    x2 = x.reshape(rows, _LANE)

    itemsize = max(t2.dtype.itemsize, x2.dtype.itemsize)
    rows_cap = max(_SUBLANE,
                   (_TARGET_BLOCK_BYTES // (_LANE * itemsize)) // _SUBLANE * _SUBLANE)
    if max_block_rows is not None:
        rows_cap = min(rows_cap, max(_SUBLANE, _round_up(max_block_rows, _SUBLANE)))
    block_rows = min(rows_cap, _round_up(rows, _SUBLANE))
    nb = pl.cdiv(rows, block_rows)
    needs_mask = (nb * block_rows != rows)

    kernel = functools.partial(
        _dice_kernel,
        block_rows=block_rows,
        n_valid_rows=rows,
        needs_mask=needs_mask,
        is_mask_exclude=is_mask_exclude,
    )

    bytes_accessed = n * (t2.dtype.itemsize + x2.dtype.itemsize) + 3 * _SUBLANE * _LANE * 4
    part = pl.pallas_call(
        kernel,
        out_shape=jax.ShapeDtypeStruct((3, _SUBLANE, _LANE), jnp.float32),
        grid_spec=pltpu.PrefetchScalarGridSpec(
            num_scalar_prefetch=0,
            grid=(nb,),
            in_specs=[
                pl.BlockSpec((block_rows, _LANE), lambda k: (k, 0)),
                pl.BlockSpec((block_rows, _LANE), lambda k: (k, 0)),
            ],
            out_specs=pl.BlockSpec((3, _SUBLANE, _LANE), lambda k: (0, 0, 0)),
        ),
        compiler_params=pltpu.CompilerParams(
            dimension_semantics=("arbitrary",),
            vmem_limit_bytes=_VMEM_LIMIT_BYTES,
        ),
        cost_estimate=pl.CostEstimate(
            flops=4 * n, transcendentals=0, bytes_accessed=bytes_accessed),
    )(t2, x2)

    # Single tiny cross-lane combine + final dice formula in plain jnp.
    sums = jnp.sum(part, axis=(1, 2))   # (3,)
    return 1.0 - 2.0 * sums[0] / (sums[1] + sums[2] + _SMOOTH)


if __name__ == "__main__":
    key = jax.random.PRNGKey(0)
    k1, k2 = jax.random.split(key)
    # NCHW-style segmentation tensors: batch=2, channels=4, spatial=16x16.
    target = (jax.random.uniform(k1, (2, 4, 16, 16)) > 0.5).astype(jnp.float32)
    pred = jax.random.uniform(k2, (2, 4, 16, 16), dtype=jnp.float32)

    # Small example (2048 elems) -> force the Pallas path (the default would take the
    # fused jnp fast path for inputs this small).
    loss = dice_coefficient_loss(target, pred, min_pallas_elements=0)
    jax.block_until_ready(loss)
    ref = _jnp_dice_loss(target, pred, False)
    assert jnp.allclose(loss, ref, rtol=1e-5, atol=1e-5), (loss, ref)

    # Exclude-mask variant through the kernel.
    target_m = target.at[0, 0].set(_VALUE_MASK_EXCLUDE)
    loss_m = dice_coefficient_loss(target_m, pred, is_mask_exclude=True,
                                   min_pallas_elements=0)
    jax.block_until_ready(loss_m)
    ref_m = _jnp_dice_loss(target_m, pred, True)
    assert jnp.allclose(loss_m, ref_m, rtol=1e-5, atol=1e-5), (loss_m, ref_m)

    # Multi-block + partial-last-block case (exercises the resident accumulator and the
    # pl.when-gated row mask) on a small input by capping the block size.
    k3, k4 = jax.random.split(k2)
    tgt3 = (jax.random.uniform(k3, (72, 128)) > 0.5).astype(jnp.float32)
    prd3 = jax.random.uniform(k4, (72, 128), dtype=jnp.float32)
    loss3 = dice_coefficient_loss(tgt3, prd3, min_pallas_elements=0, max_block_rows=16)
    jax.block_until_ready(loss3)
    ref3 = _jnp_dice_loss(tgt3, prd3, False)
    assert jnp.allclose(loss3, ref3, rtol=1e-5, atol=1e-5), (loss3, ref3)

    print("KERNEL_OK")
</pallas_src>

<mosaic_0001>
module attributes {stable_mosaic.version = 11 : i64} {
  func.func @_dice_kernel(%arg0: i32, %arg1: memref<16x128xf32, #tpu.memory_space<vmem>>, %arg2: memref<16x128xf32, #tpu.memory_space<vmem>>, %arg3: memref<3x8x128xf32, #tpu.memory_space<vmem>>) attributes {dimension_semantics = [#tpu.dimension_semantics<arbitrary>], iteration_bounds = array<i64: 1>, scalar_prefetch = 0 : i64, scratch_operands = 0 : i64, tpu.core_type = #tpu.core_type<tc>, window_params = [{transform_indices = @transform_0, window_bounds = array<i64: 16, 128>}, {transform_indices = @transform_1, window_bounds = array<i64: 16, 128>}, {pipeline_mode = #tpu.pipeline_mode<synchronous>, transform_indices = @transform_2, window_bounds = array<i64: 3, 8, 128>}]} {
    %c0_i32 = arith.constant 0 : i32
    %0 = arith.cmpi eq, %arg0, %c0_i32 : i32
    %1 = arith.extui %0 : i1 to i32
    %c0_i32_0 = arith.constant 0 : i32
    %2 = arith.cmpi ne, %1, %c0_i32_0 : i32
    scf.if %2 {
      %cst_22 = arith.constant 0.000000e+00 : f32
      %30 = vector.broadcast %cst_22 : f32 to vector<3x8x128xf32>
      %c0_23 = arith.constant 0 : index
      %c0_24 = arith.constant 0 : index
      %c0_25 = arith.constant 0 : index
      %31 = vector.load %arg3[%c0_23, %c0_24, %c0_25] : memref<3x8x128xf32, #tpu.memory_space<vmem>>, vector<3x8x128xf32>
      tpu.vector_store %arg3[%c0_23, %c0_24, %c0_25], %30 {strides = array<i32>} : memref<3x8x128xf32, #tpu.memory_space<vmem>>, vector<3x8x128xf32>,
    } else {
    }
    %c0 = arith.constant 0 : index
    %c0_1 = arith.constant 0 : index
    %3 = vector.load %arg1[%c0, %c0_1] : memref<16x128xf32, #tpu.memory_space<vmem>>, vector<16x128xf32>
    %c0_2 = arith.constant 0 : index
    %c0_3 = arith.constant 0 : index
    %4 = vector.load %arg2[%c0_2, %c0_3] : memref<16x128xf32, #tpu.memory_space<vmem>>, vector<16x128xf32>
    %c0_4 = arith.constant 0 : index
    %c0_5 = arith.constant 0 : index
    %c0_6 = arith.constant 0 : index
    %5 = vector.load %arg3[%c0_4, %c0_5, %c0_6] : memref<3x8x128xf32, #tpu.memory_space<vmem>>, vector<1x8x128xf32>
    %6 = vector.shape_cast %5 : vector<1x8x128xf32> to vector<8x128xf32>
    %7 = arith.mulf %3, %4 : vector<16x128xf32>
    %8 = vector.shape_cast %7 : vector<16x128xf32> to vector<2x8x128xf32>
    %cst = arith.constant dense<0.000000e+00> : vector<8x128xf32>
    %9 = vector.multi_reduction <add>, %8, %cst [0] : vector<2x8x128xf32> to vector<8x128xf32>
    %10 = arith.addf %6, %9 : vector<8x128xf32>
    %c0_7 = arith.constant 0 : index
    %c0_8 = arith.constant 0 : index
    %c0_9 = arith.constant 0 : index
    %11 = vector.load %arg3[%c0_7, %c0_8, %c0_9] : memref<3x8x128xf32, #tpu.memory_space<vmem>>, vector<1x8x128xf32>
    %12 = vector.shape_cast %11 : vector<1x8x128xf32> to vector<8x128xf32>
    %13 = vector.shape_cast %10 : vector<8x128xf32> to vector<1x8x128xf32>
    tpu.vector_store %arg3[%c0_7, %c0_8, %c0_9], %13 {strides = array<i32>} : memref<3x8x128xf32, #tpu.memory_space<vmem>>, vector<1x8x128xf32>,
    %c1 = arith.constant 1 : index
    %c0_10 = arith.constant 0 : index
    %c0_11 = arith.constant 0 : index
    %14 = vector.load %arg3[%c1, %c0_10, %c0_11] : memref<3x8x128xf32, #tpu.memory_space<vmem>>, vector<1x8x128xf32>
    %15 = vector.shape_cast %14 : vector<1x8x128xf32> to vector<8x128xf32>
    %16 = vector.shape_cast %3 : vector<16x128xf32> to vector<2x8x128xf32>
    %cst_12 = arith.constant dense<0.000000e+00> : vector<8x128xf32>
    %17 = vector.multi_reduction <add>, %16, %cst_12 [0] : vector<2x8x128xf32> to vector<8x128xf32>
    %18 = arith.addf %15, %17 : vector<8x128xf32>
    %c1_13 = arith.constant 1 : index
    %c0_14 = arith.constant 0 : index
    %c0_15 = arith.constant 0 : index
    %19 = vector.load %arg3[%c1_13, %c0_14, %c0_15] : memref<3x8x128xf32, #tpu.memory_space<vmem>>, vector<1x8x128xf32>
    %20 = vector.shape_cast %19 : vector<1x8x128xf32> to vector<8x128xf32>
    %21 = vector.shape_cast %18 : vector<8x128xf32> to vector<1x8x128xf32>
    tpu.vector_store %arg3[%c1_13, %c0_14, %c0_15], %21 {strides = array<i32>} : memref<3x8x128xf32, #tpu.memory_space<vmem>>, vector<1x8x128xf32>,
    %c2 = arith.constant 2 : index
    %c0_16 = arith.constant 0 : index
    %c0_17 = arith.constant 0 : index
    %22 = vector.load %arg3[%c2, %c0_16, %c0_17] : memref<3x8x128xf32, #tpu.memory_space<vmem>>, vector<1x8x128xf32>
    %23 = vector.shape_cast %22 : vector<1x8x128xf32> to vector<8x128xf32>
    %24 = vector.shape_cast %4 : vector<16x128xf32> to vector<2x8x128xf32>
    %cst_18 = arith.constant dense<0.000000e+00> : vector<8x128xf32>
    %25 = vector.multi_reduction <add>, %24, %cst_18 [0] : vector<2x8x128xf32> to vector<8x128xf32>
    %26 = arith.addf %23, %25 : vector<8x128xf32>
    %c2_19 = arith.constant 2 : index
    %c0_20 = arith.constant 0 : index
    %c0_21 = arith.constant 0 : index
    %27 = vector.load %arg3[%c2_19, %c0_20, %c0_21] : memref<3x8x128xf32, #tpu.memory_space<vmem>>, vector<1x8x128xf32>
    %28 = vector.shape_cast %27 : vector<1x8x128xf32> to vector<8x128xf32>
    %29 = vector.shape_cast %26 : vector<8x128xf32> to vector<1x8x128xf32>
    tpu.vector_store %arg3[%c2_19, %c0_20, %c0_21], %29 {strides = array<i32>} : memref<3x8x128xf32, #tpu.memory_space<vmem>>, vector<1x8x128xf32>,
    return
  }
  func.func @transform_0(%arg0: i32) -> (i32, i32) {
    %c0_i32 = arith.constant 0 : i32
    %c0_i32_0 = arith.constant 0 : i32
    return %arg0, %c0_i32 : i32, i32
  }
  func.func @transform_1(%arg0: i32) -> (i32, i32) {
    %c0_i32 = arith.constant 0 : i32
    %c0_i32_0 = arith.constant 0 : i32
    return %arg0, %c0_i32 : i32, i32
  }
  func.func @transform_2(%arg0: i32) -> (i32, i32, i32) {
    %c0_i32 = arith.constant 0 : i32
    %c0_i32_0 = arith.constant 0 : i32
    %c0_i32_1 = arith.constant 0 : i32
    %c0_i32_2 = arith.constant 0 : i32
    return %c0_i32, %c0_i32_0, %c0_i32_1 : i32, i32, i32
  }
}

</mosaic_0001>

<llo_original>
// kernel: tpu_custom_call.1
$region0: #{tpu_custom_call.1}
  #allocation0 [shape = 'u32[]', space=smem, size = 0x4, offset = 0x4, fixed_abs, tag = 'smem constant byte address 0x4 - core index']
  #allocation1 [shape = 'u32[144,128]{1,0:T(1,128)}', space=vmem, size = 0x12000, scoped, tag = 'internal scratch']
  %s0 = inlined_call_operand.hbm [shape: f32[16,128], index: 0, kind: input, shape index: {}]
  %s1 = inlined_call_operand.hbm [shape: f32[16,128], index: 1, kind: input, shape index: {}]
  %s2 = inlined_call_operand.hbm [shape: f32[3,8,128], index: 2, kind: output, shape index: {}]
  %s3 = sld [smem:[#allocation0]]
  $region30: #{tpu_custom_call.1} parent=0
    _
  %s5 = ssub.s32 1, %s3
  %s6 = scalar_select 0, %s5, %s3
  $region1: #{tpu_custom_call.1} parent=0
    #allocation2 [shape = 'u8[8192]{0}', space=vmem, size = 0x2000, scoped, tag = 'input window, operand 0, single buffered']
    #allocation3 [shape = 's32[1]{0}', space=sflag, size = 0x4, scoped, tag = 'scoped memory for tpu_custom_call.1']
    #allocation4 [shape = 's32[1]{0}', space=sflag, size = 0x4, scoped, tag = 'scoped memory for tpu_custom_call.1']
    #allocation5 [shape = 'u8[8192]{0}', space=vmem, size = 0x2000, scoped, tag = 'input window, operand 1, single buffered']
    #allocation6 [shape = 's32[1]{0}', space=sflag, size = 0x4, scoped, tag = 'scoped memory for tpu_custom_call.1']
    #allocation7 [shape = 'u8[12288]{0}', space=vmem, size = 0x3000, scoped, tag = 'output window, operand 0, single buffered']
    %7 = vsyncpa [#allocation3], 0
    %8 = vsyncpa [#allocation6], 0
    %9 = vsyncpa [#allocation4], 0
    // Predicated region
    $region2: #{tpu_custom_call.1} parent=1 // pred_check
      _
    $region3: #{tpu_custom_call.1} parent=1 // pred_check_branch
      %11 = sbr.rel (0) target = $region5
    $region4: #{tpu_custom_call.1} parent=1 // pred_region
      %s13 = ssub.s32 256, 256
      %14 = vsyncadd [#allocation3], %s13
      %s15 = sshll.u32 [#allocation2], 4
      %s16 = int_to_ptr.vmem [resolvable:$true] %s15
      %21 = dma.hbm_to_vmem [thread:$0]  %s0, 256, %s16, [#allocation3], 128, 128, 8
    $region5: #{tpu_custom_call.1} parent=1 // pred_fallthru
      _
    // Predicated region
    $region6: #{tpu_custom_call.1} parent=1 // pred_check
      _
    $region7: #{tpu_custom_call.1} parent=1 // pred_check_branch
      %23 = sbr.rel (0) target = $region9
    $region8: #{tpu_custom_call.1} parent=1 // pred_region
      %s25 = ssub.s32 256, 256
      %26 = vsyncadd [#allocation6], %s25
      %s27 = sshll.u32 [#allocation5], 4
      %s28 = int_to_ptr.vmem [resolvable:$true] %s27
      %33 = dma.hbm_to_vmem [thread:$0]  %s1, 256, %s28, [#allocation6], 128, 128, 8
    $region9: #{tpu_custom_call.1} parent=1 // pred_fallthru
      _
    // Predicated region
    $region10: #{tpu_custom_call.1} parent=1 // pred_check
      _
    $region11: #{tpu_custom_call.1} parent=1 // pred_check_branch
      %35 = sbr.rel (0) target = $region13
    $region12: #{tpu_custom_call.1} parent=1 // pred_region
      %36 = dma.done [#allocation3], 256
    $region13: #{tpu_custom_call.1} parent=1 // pred_fallthru
      _
    // Predicated region
    $region14: #{tpu_custom_call.1} parent=1 // pred_check
      _
    $region15: #{tpu_custom_call.1} parent=1 // pred_check_branch
      %38 = sbr.rel (0) target = $region17
    $region16: #{tpu_custom_call.1} parent=1 // pred_region
      %39 = dma.done [#allocation6], 256
    $region17: #{tpu_custom_call.1} parent=1 // pred_fallthru
      _
    %p40 = scmp.eq.s32.totalorder 0, 0
    // Predicated region
    $region18: #{tpu_custom_call.1} parent=1 // pred_check
      %p41 = pneg %p40
    $region19: #{tpu_custom_call.1} parent=1 // pred_check_branch
      %43 = sbr.rel (%p41) target = $region21
    $region20: #{tpu_custom_call.1} parent=1 // pred_region
      %44 = vst [vmem:[#allocation7] sm:$0xff] 0.0
      %45 = vst [vmem:[#allocation7 + $0x8] sm:$0xff] 0.0
      %46 = vst [vmem:[#allocation7 + $0x10] sm:$0xff] 0.0
    $region21: #{tpu_custom_call.1} parent=1 // pred_fallthru
      _
    %v47 = vld [vmem:[#allocation2] sm:$0xff]
    %v48 = vld [vmem:[#allocation2 + $0x8] sm:$0xff]
    %v49 = vld [vmem:[#allocation5] sm:$0xff]
    %v50 = vld [vmem:[#allocation5 + $0x8] sm:$0xff]
    %v51 = vld [vmem:[#allocation7] sm:$0xff]
    %v52 = vmul.f32 %v47, %v49
    %v53 = vmul.f32 %v48, %v50
    %v54 = vadd.f32 %v52, %v53
    %v55 = vadd.f32 %v51, %v54
    %56 = vst [vmem:[#allocation7] sm:$0xff] %v55
    %s57 = scalar_lea.vmem [#allocation7], 8
    %v58 = vld [vmem:[%s57] sm:$0xff]
    %v59 = vadd.f32 %v47, %v48
    %v60 = vadd.f32 %v58, %v59
    %61 = vst [vmem:[%s57] sm:$0xff] %v60
    %s62 = scalar_lea.vmem [#allocation7], 16
    %v63 = vld [vmem:[%s62] sm:$0xff]
    %v64 = vadd.f32 %v49, %v50
    %v65 = vadd.f32 %v63, %v64
    %66 = vst [vmem:[%s62] sm:$0xff] %v65
    // Predicated region
    $region22: #{tpu_custom_call.1} parent=1 // pred_check
      _
    $region23: #{tpu_custom_call.1} parent=1 // pred_check_branch
      %68 = sbr.rel (0) target = $region25
    $region24: #{tpu_custom_call.1} parent=1 // pred_region
      %s70 = ssub.s32 384, 384
      %71 = vsyncadd [#allocation4], %s70
      %s72 = sshll.u32 [#allocation7], 4
      %s73 = int_to_ptr.vmem [resolvable:$true] %s72
      %78 = dma.vmem_to_hbm [thread:$0]  %s73, 384, %s2, [#allocation4], 128, 128, 8
    $region25: #{tpu_custom_call.1} parent=1 // pred_fallthru
      _
    // Predicated region
    $region26: #{tpu_custom_call.1} parent=1 // pred_check
      _
    $region27: #{tpu_custom_call.1} parent=1 // pred_check_branch
      %80 = sbr.rel (0) target = $region29
    $region28: #{tpu_custom_call.1} parent=1 // pred_region
      %81 = dma.done [#allocation4], 384
    $region29: #{tpu_custom_call.1} parent=1 // pred_fallthru
      _
    %82 = vsyncpa [#allocation3], 1
    %83 = vsyncpa [#allocation6], 1
    %84 = vsyncpa [#allocation4], 1

</llo_original>
